<compile_context>
chip_gen: v7x
topology: tpu7x:2x2x1
jax: 0.10.0
libtpu: 0.0.40
codegen_flags: <defaults>
</compile_context>

<pallas_src>
import jax
import jax.numpy as jnp
from jax.experimental import pallas as pl
from jax.experimental.pallas import tpu as pltpu


def _dcp_conv_kernel(p_ref, w12_ref, w3_ref, b_ref, o_ref):
    # p_ref:   (TM, KK*Cin)     im2col patches for this M-tile
    # w12_ref: (KK*Cin, R2)     conv1 folded into the Tucker core
    # w3_ref:  (R2, Cout_pad)   conv3 1x1 weight (transposed, lane-padded)
    # b_ref:   (1, Cout_pad)    conv3 bias (f32, lane-padded)
    # o_ref:   (TM, Cout_pad)
    h = jnp.dot(p_ref[...], w12_ref[...], preferred_element_type=jnp.float32)
    o = jnp.dot(h.astype(w3_ref.dtype), w3_ref[...],
                preferred_element_type=jnp.float32)
    o_ref[...] = (o + b_ref[...]).astype(o_ref.dtype)


def dcp_conv2d(x_nchw, w1, core, w3, bias, *, stride=(1, 1), padding=(0, 0),
               dilation=(1, 1), tm=512, compute_dtype=None):
    """x_nchw: [N, Cin, H, W]; w1: [R1, Cin, 1, 1]; core: [R2, R1, Kh, Kw];
    w3: [Cout, R2, 1, 1]; bias: [Cout].  Returns [N, Cout, Ho, Wo]."""
    N, Cin, H, W = x_nchw.shape
    R2, R1, Kh, Kw = core.shape
    Cout = w3.shape[0]
    sh, sw = stride
    ph, pw = padding
    dh, dw = dilation
    if compute_dtype is None:
        compute_dtype = x_nchw.dtype
    out_dtype = x_nchw.dtype

    # ---- glue: im2col in plain JAX -> one lane-dense [M, KK*Cin] slab ----
    # TODO(synk): for stride-1 3x3 at large C/H/W, replace host-side im2col with
    # an in-kernel haloed row-tile DMA (memory_space=pl.ANY) to avoid the
    # KK-fold HBM replication of the input.
    x = jnp.transpose(x_nchw, (0, 2, 3, 1))                      # NHWC
    x = jnp.pad(x, ((0, 0), (ph, ph), (pw, pw), (0, 0)))
    Hp, Wp = H + 2 * ph, W + 2 * pw
    Ho = (Hp - ((Kh - 1) * dh + 1)) // sh + 1
    Wo = (Wp - ((Kw - 1) * dw + 1)) // sw + 1
    M = N * Ho * Wo
    KK = Kh * Kw
    KKC = KK * Cin
    cols = []
    for kh in range(Kh):
        for kw in range(Kw):
            sl = x[:,
                   kh * dh: kh * dh + sh * (Ho - 1) + 1: sh,
                   kw * dw: kw * dw + sw * (Wo - 1) + 1: sw, :]
            cols.append(sl.reshape(M, Cin))
    patches = jnp.concatenate(cols, axis=1)                      # [M, KK*Cin]

    # Row tiling: keep tiles large, but give the grid >= 2 steps (v7x: 2 TCs).
    tm = min(tm, max(8, M // 2))
    tm = max(8, (tm // 8) * 8)
    Mp = ((M + tm - 1) // tm) * tm
    if Mp != M:
        patches = jnp.pad(patches, ((0, Mp - M), (0, 0)))
    patches = patches.astype(compute_dtype)

    # ---- fold conv1 (1x1) into the KxK core (exact: all-linear, fold in f32) ----
    w1_mat = jnp.transpose(w1[:, :, 0, 0]).astype(jnp.float32)             # [Cin, R1]
    core_mat = jnp.transpose(core, (2, 3, 1, 0)).astype(jnp.float32)       # [Kh,Kw,R1,R2]
    core_mat = core_mat.reshape(KK, R1, R2)
    w12 = jnp.einsum("cr,krs->kcs", w1_mat, core_mat).reshape(KKC, R2)     # [KK*Cin, R2]
    w12 = w12.astype(compute_dtype)

    # conv3 weight / bias, lane-padded to a multiple of 128 output channels so
    # the kernel's output stores are unmasked (lane-dense).
    Cout_pad = ((Cout + 127) // 128) * 128
    w3_mat = jnp.transpose(w3[:, :, 0, 0]).astype(jnp.float32)             # [R2, Cout]
    w3_pad = jnp.pad(w3_mat, ((0, 0), (0, Cout_pad - Cout))).astype(compute_dtype)
    b_pad = jnp.pad(bias.astype(jnp.float32).reshape(1, Cout),
                    ((0, 0), (0, Cout_pad - Cout)))              # f32 epilogue

    esize = jnp.dtype(compute_dtype).itemsize
    cost = pl.CostEstimate(
        flops=2 * Mp * (KKC * R2 + R2 * Cout_pad),
        transcendentals=0,
        bytes_accessed=(Mp * KKC * esize + KKC * R2 * esize
                        + R2 * Cout_pad * esize + Cout_pad * 4
                        + Mp * Cout_pad * jnp.dtype(out_dtype).itemsize))

    out = pl.pallas_call(
        _dcp_conv_kernel,
        out_shape=jax.ShapeDtypeStruct((Mp, Cout_pad), out_dtype),
        grid_spec=pltpu.PrefetchScalarGridSpec(
            num_scalar_prefetch=0,
            grid=(Mp // tm,),
            in_specs=[
                pl.BlockSpec((tm, KKC), lambda i: (i, 0)),
                pl.BlockSpec((KKC, R2), lambda i: (0, 0)),
                pl.BlockSpec((R2, Cout_pad), lambda i: (0, 0)),
                pl.BlockSpec((1, Cout_pad), lambda i: (0, 0)),
            ],
            out_specs=pl.BlockSpec((tm, Cout_pad), lambda i: (i, 0)),
        ),
        compiler_params=pltpu.CompilerParams(
            dimension_semantics=("parallel",)),
        cost_estimate=cost,
    )(patches, w12, w3_pad, b_pad)

    out = out[:M, :Cout].reshape(N, Ho, Wo, Cout)
    return jnp.transpose(out, (0, 3, 1, 2))                      # NCHW


def _ref_forward(x, w1, core, w3, bias, stride, padding, dilation):
    dn = ("NCHW", "OIHW", "NCHW")
    y = jax.lax.conv_general_dilated(x, w1, (1, 1), [(0, 0), (0, 0)],
                                     dimension_numbers=dn)
    y = jax.lax.conv_general_dilated(y, core, stride,
                                     [(padding[0], padding[0]),
                                      (padding[1], padding[1])],
                                     rhs_dilation=dilation,
                                     dimension_numbers=dn)
    y = jax.lax.conv_general_dilated(y, w3, (1, 1), [(0, 0), (0, 0)],
                                     dimension_numbers=dn)
    return y + bias.reshape(1, -1, 1, 1)


if __name__ == "__main__":
    # Module config: dcpConv2D(in_channels=4, out_channels=8, kernel_size=3,
    #                          R1_ratio=1.0, R2_ratio=1.0, stride=1, padding=1)
    in_channels, out_channels, K = 4, 8, 3
    R1, R2 = in_channels, out_channels        # ratios = 1.0
    stride, padding, dilation = (1, 1), (1, 1), (1, 1)
    N, H, W = 2, 16, 16

    key = jax.random.PRNGKey(0)
    kx, k1, k2, k3, kb = jax.random.split(key, 5)

    x = jax.random.normal(kx, (N, in_channels, H, W), dtype=jnp.float32)
    # Deterministic synthetic parameters (PyTorch-shaped conv weights).
    w1 = jax.random.uniform(k1, (R1, in_channels, 1, 1), jnp.float32,
                            -0.5, 0.5) / jnp.sqrt(in_channels)
    core = jax.random.uniform(k2, (R2, R1, K, K), jnp.float32,
                              -0.5, 0.5) / jnp.sqrt(R1 * K * K)
    w3 = jax.random.uniform(k3, (out_channels, R2, 1, 1), jnp.float32,
                            -0.5, 0.5) / jnp.sqrt(R2)
    bias = jax.random.uniform(kb, (out_channels,), jnp.float32, -0.1, 0.1)

    y_ref = _ref_forward(x, w1, core, w3, bias, stride, padding, dilation)

    # f32 path (bit-for-bit comparable to the XLA conv reference at tight tol).
    y = dcp_conv2d(x, w1, core, w3, bias,
                   stride=stride, padding=padding, dilation=dilation)
    y = jax.block_until_ready(y)
    assert y.shape == y_ref.shape, (y.shape, y_ref.shape)
    assert jnp.allclose(y, y_ref, atol=1e-4, rtol=1e-4), \
        float(jnp.max(jnp.abs(y - y_ref)))

    # bf16 streamed path (v6e/v7x bandwidth optimization; f32 accumulate/epilogue).
    y_bf16 = dcp_conv2d(x, w1, core, w3, bias,
                        stride=stride, padding=padding, dilation=dilation,
                        compute_dtype=jnp.bfloat16)
    y_bf16 = jax.block_until_ready(y_bf16)
    assert jnp.allclose(y_bf16, y_ref, atol=5e-2, rtol=5e-2), \
        float(jnp.max(jnp.abs(y_bf16 - y_ref)))

    print("KERNEL_OK")
</pallas_src>

<mosaic_0001>
module attributes {stable_mosaic.version = 11 : i64} {
  func.func @_dcp_conv_kernel(%arg0: i32, %arg1: memref<256x36xf32, #tpu.memory_space<vmem>>, %arg2: memref<36x8xf32, #tpu.memory_space<vmem>>, %arg3: memref<8x128xf32, #tpu.memory_space<vmem>>, %arg4: memref<1x128xf32, #tpu.memory_space<vmem>>, %arg5: memref<256x128xf32, #tpu.memory_space<vmem>>) attributes {dimension_semantics = [#tpu.dimension_semantics<parallel>], iteration_bounds = array<i64: 2>, scalar_prefetch = 0 : i64, scratch_operands = 0 : i64, tpu.core_type = #tpu.core_type<tc>, window_params = [{transform_indices = @transform_0, window_bounds = array<i64: 256, 36>}, {pipeline_mode = #tpu.pipeline_mode<synchronous>, transform_indices = @transform_1, window_bounds = array<i64: 36, 8>}, {pipeline_mode = #tpu.pipeline_mode<synchronous>, transform_indices = @transform_2, window_bounds = array<i64: 8, 128>}, {pipeline_mode = #tpu.pipeline_mode<synchronous>, transform_indices = @transform_3, window_bounds = array<i64: 1, 128>}, {transform_indices = @transform_4, window_bounds = array<i64: 256, 128>}]} {
    %c0 = arith.constant 0 : index
    %c0_0 = arith.constant 0 : index
    %0 = vector.load %arg1[%c0, %c0_0] : memref<256x36xf32, #tpu.memory_space<vmem>>, vector<256x36xf32>
    %c0_1 = arith.constant 0 : index
    %c0_2 = arith.constant 0 : index
    %1 = vector.load %arg2[%c0_1, %c0_2] : memref<36x8xf32, #tpu.memory_space<vmem>>, vector<36x8xf32>
    %cst = arith.constant dense<0.000000e+00> : vector<256x8xf32>
    %2 = tpu.matmul %0, %1, %cst {dimension_numbers = #tpu.dot_dimension_numbers<[1], [0], [0], [1], [0, 0, 1, 1], [], []>} : vector<256x36xf32>, vector<36x8xf32>, vector<256x8xf32> -> vector<256x8xf32>
    %c0_3 = arith.constant 0 : index
    %c0_4 = arith.constant 0 : index
    %3 = vector.load %arg3[%c0_3, %c0_4] : memref<8x128xf32, #tpu.memory_space<vmem>>, vector<8x128xf32>
    %cst_5 = arith.constant dense<0.000000e+00> : vector<256x128xf32>
    %4 = tpu.matmul %2, %3, %cst_5 {dimension_numbers = #tpu.dot_dimension_numbers<[1], [0], [0], [1], [0, 0, 1, 1], [], []>} : vector<256x8xf32>, vector<8x128xf32>, vector<256x128xf32> -> vector<256x128xf32>
    %c0_6 = arith.constant 0 : index
    %c0_7 = arith.constant 0 : index
    %5 = vector.load %arg4[%c0_6, %c0_7] : memref<1x128xf32, #tpu.memory_space<vmem>>, vector<1x128xf32>
    %6 = vector.broadcast %5 : vector<1x128xf32> to vector<256x128xf32>
    %7 = arith.addf %4, %6 : vector<256x128xf32>
    %c0_8 = arith.constant 0 : index
    %c0_9 = arith.constant 0 : index
    %8 = vector.load %arg5[%c0_8, %c0_9] : memref<256x128xf32, #tpu.memory_space<vmem>>, vector<256x128xf32>
    tpu.vector_store %arg5[%c0_8, %c0_9], %7 {strides = array<i32>} : memref<256x128xf32, #tpu.memory_space<vmem>>, vector<256x128xf32>,
    return
  }
  func.func @transform_0(%arg0: i32) -> (i32, i32) {
    %c0_i32 = arith.constant 0 : i32
    %c0_i32_0 = arith.constant 0 : i32
    return %arg0, %c0_i32 : i32, i32
  }
  func.func @transform_1(%arg0: i32) -> (i32, i32) {
    %c0_i32 = arith.constant 0 : i32
    %c0_i32_0 = arith.constant 0 : i32
    %c0_i32_1 = arith.constant 0 : i32
    return %c0_i32, %c0_i32_0 : i32, i32
  }
  func.func @transform_2(%arg0: i32) -> (i32, i32) {
    %c0_i32 = arith.constant 0 : i32
    %c0_i32_0 = arith.constant 0 : i32
    %c0_i32_1 = arith.constant 0 : i32
    return %c0_i32, %c0_i32_0 : i32, i32
  }
  func.func @transform_3(%arg0: i32) -> (i32, i32) {
    %c0_i32 = arith.constant 0 : i32
    %c0_i32_0 = arith.constant 0 : i32
    %c0_i32_1 = arith.constant 0 : i32
    return %c0_i32, %c0_i32_0 : i32, i32
  }
  func.func @transform_4(%arg0: i32) -> (i32, i32) {
    %c0_i32 = arith.constant 0 : i32
    %c0_i32_0 = arith.constant 0 : i32
    return %arg0, %c0_i32 : i32, i32
  }
}

</mosaic_0001>

<llo_original>
// kernel: tpu_custom_call.1
$region0: #{tpu_custom_call.1}
  #allocation0 [shape = 'u32[]', space=smem, size = 0x4, offset = 0x4, fixed_abs, tag = 'smem constant byte address 0x4 - core index']
  #allocation1 [shape = 'u32[144,128]{1,0:T(1,128)}', space=vmem, size = 0x12000, scoped, tag = 'internal scratch']
  %s0 = inlined_call_operand.vmem [shape: f32[512,36], index: 0, kind: input, shape index: {}]
  %s1 = inlined_call_operand.vmem [shape: f32[36,8], index: 1, kind: input, shape index: {}]
  %s2 = inlined_call_operand.vmem [shape: f32[8,128], index: 2, kind: input, shape index: {}]
  %s3 = inlined_call_operand.vmem [shape: f32[1,128], index: 3, kind: input, shape index: {}]
  %s4 = inlined_call_operand.hbm [shape: f32[512,128], index: 4, kind: output, shape index: {}]
  %s5 = sld [smem:[#allocation0]]
  $region49: #{tpu_custom_call.1} parent=0
    _
  %s7 = ssub.s32 1, %s5
  %s8 = scalar_select 0, %s7, %s5
  $region1: #{tpu_custom_call.1} parent=0
    #allocation2 [shape = 'u8[262144]{0}', space=vmem, size = 0x40000, scoped, tag = 'output window, operand 0']
    #allocation3 [shape = 's32[2]{0}', space=sflag, size = 0x8, scoped, tag = 'scoped memory for tpu_custom_call.1']
    %9 = vsyncpa [#allocation3], 0
    %s10 = scalar_lea.sflag [#allocation3], 1
    %11 = vsyncpa %s10, 0
    loop: start=0, step=1, limit=4
    $region2: #{tpu_custom_call.1} parent=1 // loop_pre_header
      _
    $region3: #{tpu_custom_call.1} parent=1 // loop_header
      %s13 = sphi 0, %s17
      %p14 = scmp.ge.s32.totalorder %s13, 4
      %s23 = sphi 0, %s25
      %s26 = sphi 0, %s23
      %s27 = sphi 0, %s26
      %s43 = sphi 0, %s27
      %s47 = sphi 0, %s47
      %s49 = sphi 0, %s47
      %s50 = sphi 0, %s49
      %s64 = sphi 0, %s50
      %s68 = sphi 0, %s68
      %s70 = sphi 0, %s68
      %s71 = sphi 0, %s70
      %s85 = sphi 0, %s71
      %s89 = sphi 0, %s89
      %s91 = sphi 0, %s89
      %s92 = sphi 0, %s91
      %s106 = sphi 0, %s92
      %s112 = sphi 0, %s114
      %s115 = sphi 0, %s112
      %s116 = sphi 0, %s115
      %s132 = sphi 0, %s116
    $region4: #{tpu_custom_call.1} parent=1 // loop_header_branch
      %16 = sbr.rel (%p14) target = $region8
    $region5: #{tpu_custom_call.1} parent=1 // loop_body
      %s18 = ssub.s32 %s13, 1
      %s19 = ssub.s32 %s13, 2
      %s20 = sadd.s32 %s13, 1
      %s21 = ssub.s32 %s13, %s20
      %p22 = scmp.eq.s32.totalorder %s21, 0
      %s24 = sadd.s32 %s23, 1
      %s25 = scalar_select %p22, %s23, %s24
      %p28 = pneg %p22
      %p29 = scmp.eq.s32.totalorder %s13, 1
      %p30 = por %p28, %p29
      %p31 = scmp.ne.s32.totalorder %s23, %s26
      %p32 = scmp.eq.s32.totalorder %s13, 0
      %p33 = por %p31, %p32
      %p34 = scmp.ne.s32.totalorder %s23, %s26
      %p35 = scmp.eq.s32.totalorder %s18, 1
      %p36 = por %p34, %p35
      %p37 = scmp.ne.s32.totalorder %s26, %s27
      %p38 = scmp.eq.s32.totalorder %s18, 0
      %p39 = por %p37, %p38
      %p40 = scmp.ne.s32.totalorder %s26, %s27
      %p41 = scmp.eq.s32.totalorder %s19, 1
      %p42 = por %p40, %p41
      %p44 = scmp.ne.s32.totalorder %s27, %s43
      %p45 = scmp.eq.s32.totalorder %s19, 0
      %p46 = por %p44, %p45
      %s48 = sadd.s32 %s47, 1
      %p51 = scmp.eq.s32.totalorder %s13, 1
      %p52 = scmp.ne.s32.totalorder %s47, %s49
      %p53 = scmp.eq.s32.totalorder %s13, 0
      %p54 = por %p52, %p53
      %p55 = scmp.ne.s32.totalorder %s47, %s49
      %p56 = scmp.eq.s32.totalorder %s18, 1
      %p57 = por %p55, %p56
      %p58 = scmp.ne.s32.totalorder %s49, %s50
      %p59 = scmp.eq.s32.totalorder %s18, 0
      %p60 = por %p58, %p59
      %p61 = scmp.ne.s32.totalorder %s49, %s50
      %p62 = scmp.eq.s32.totalorder %s19, 1
      %p63 = por %p61, %p62
      %p65 = scmp.ne.s32.totalorder %s50, %s64
      %p66 = scmp.eq.s32.totalorder %s19, 0
      %p67 = por %p65, %p66
      %s69 = sadd.s32 %s68, 1
      %p72 = scmp.eq.s32.totalorder %s13, 1
      %p73 = scmp.ne.s32.totalorder %s68, %s70
      %p74 = scmp.eq.s32.totalorder %s13, 0
      %p75 = por %p73, %p74
      %p76 = scmp.ne.s32.totalorder %s68, %s70
      %p77 = scmp.eq.s32.totalorder %s18, 1
      %p78 = por %p76, %p77
      %p79 = scmp.ne.s32.totalorder %s70, %s71
      %p80 = scmp.eq.s32.totalorder %s18, 0
      %p81 = por %p79, %p80
      %p82 = scmp.ne.s32.totalorder %s70, %s71
      %p83 = scmp.eq.s32.totalorder %s19, 1
      %p84 = por %p82, %p83
      %p86 = scmp.ne.s32.totalorder %s71, %s85
      %p87 = scmp.eq.s32.totalorder %s19, 0
      %p88 = por %p86, %p87
      %s90 = sadd.s32 %s89, 1
      %p93 = scmp.eq.s32.totalorder %s13, 1
      %p94 = scmp.ne.s32.totalorder %s89, %s91
      %p95 = scmp.eq.s32.totalorder %s13, 0
      %p96 = por %p94, %p95
      %p97 = scmp.ne.s32.totalorder %s89, %s91
      %p98 = scmp.eq.s32.totalorder %s18, 1
      %p99 = por %p97, %p98
      %p100 = scmp.ne.s32.totalorder %s91, %s92
      %p101 = scmp.eq.s32.totalorder %s18, 0
      %p102 = por %p100, %p101
      %p103 = scmp.ne.s32.totalorder %s91, %s92
      %p104 = scmp.eq.s32.totalorder %s19, 1
      %p105 = por %p103, %p104
      %p107 = scmp.ne.s32.totalorder %s92, %s106
      %p108 = scmp.eq.s32.totalorder %s19, 0
      %p109 = por %p107, %p108
      %s110 = ssub.s32 %s13, %s20
      %p111 = scmp.eq.s32.totalorder %s110, 0
      %s113 = sadd.s32 %s112, 1
      %s114 = scalar_select %p111, %s112, %s113
      %p117 = pneg %p111
      %p118 = scmp.eq.s32.totalorder %s13, 1
      %p119 = por %p117, %p118
      %p120 = scmp.ne.s32.totalorder %s112, %s115
      %p121 = scmp.eq.s32.totalorder %s13, 0
      %p122 = por %p120, %p121
      %p123 = scmp.ne.s32.totalorder %s112, %s115
      %p124 = scmp.eq.s32.totalorder %s18, 1
      %p125 = por %p123, %p124
      %p126 = scmp.ne.s32.totalorder %s115, %s116
      %p127 = scmp.eq.s32.totalorder %s18, 0
      %p128 = por %p126, %p127
      %p129 = scmp.ne.s32.totalorder %s115, %s116
      %p130 = scmp.eq.s32.totalorder %s19, 1
      %p131 = por %p129, %p130
      %p133 = scmp.ne.s32.totalorder %s116, %s132
      %p134 = scmp.eq.s32.totalorder %s19, 0
      %p135 = por %p133, %p134
      %p136 = scmp.le.s32.totalorder 1, %s13
      %p137 = scmp.lt.s32.totalorder %s13, 3
      %p138 = pnand %p136, %p137
      %p139 = pneg %p138
      // Predicated region
      $region9: #{tpu_custom_call.1} parent=5 // pred_check
        _
      $region10: #{tpu_custom_call.1} parent=5 // pred_check_branch
        %141 = sbr.rel (%p138) target = $region12
      $region11: #{tpu_custom_call.1} parent=5 // pred_region
        %s142 = ssub.s32 %s13, 1
        // Predicated region
        $region13: #{tpu_custom_call.1} parent=11 // pred_check
          %p143 = pneg %p60
        $region14: #{tpu_custom_call.1} parent=11 // pred_check_branch
          %145 = sbr.rel (%p143) target = $region16
        $region15: #{tpu_custom_call.1} parent=11 // pred_region
          _
        $region16: #{tpu_custom_call.1} parent=11 // pred_fallthru
          _
        // Predicated region
        $region17: #{tpu_custom_call.1} parent=11 // pred_check
          %p146 = pneg %p81
        $region18: #{tpu_custom_call.1} parent=11 // pred_check_branch
          %148 = sbr.rel (%p146) target = $region20
        $region19: #{tpu_custom_call.1} parent=11 // pred_region
          _
        $region20: #{tpu_custom_call.1} parent=11 // pred_fallthru
          _
        // Predicated region
        $region21: #{tpu_custom_call.1} parent=11 // pred_check
          %p149 = pneg %p102
        $region22: #{tpu_custom_call.1} parent=11 // pred_check_branch
          %151 = sbr.rel (%p149) target = $region24
        $region23: #{tpu_custom_call.1} parent=11 // pred_region
          _
        $region24: #{tpu_custom_call.1} parent=11 // pred_fallthru
          _
      $region12: #{tpu_custom_call.1} parent=5 // pred_fallthru
        _
      %p152 = scmp.lt.s32.totalorder %s13, 2
      // Predicated region
      $region25: #{tpu_custom_call.1} parent=5 // pred_check
        %p153 = pneg %p152
      $region26: #{tpu_custom_call.1} parent=5 // pred_check_branch
        %155 = sbr.rel (%p153) target = $region28
      $region27: #{tpu_custom_call.1} parent=5 // pred_region
        // Predicated region
        $region29: #{tpu_custom_call.1} parent=27 // pred_check
          %p156 = pneg %p33
        $region30: #{tpu_custom_call.1} parent=27 // pred_check_branch
          %158 = sbr.rel (%p156) target = $region32
        $region31: #{tpu_custom_call.1} parent=27 // pred_region
          %s159 = smul.u32 32, %s13
          %p160 = scmp.lt.s32.totalorder %s159, 63
          %s161 = scalar_select %p160, %s159, 63
          %s162 = smul.addr %s161, 8
          %s163 = scalar_lea.vmem %s0, %s162
          %s164 = smul.u32 32, %s13
        $region32: #{tpu_custom_call.1} parent=27 // pred_fallthru
          _
      $region28: #{tpu_custom_call.1} parent=5 // pred_fallthru
        _
      %p165 = scmp.le.s32.totalorder 1, %s13
      %p166 = scmp.lt.s32.totalorder %s13, 3
      %p167 = pnand %p165, %p166
      %p168 = pneg %p167
      // Predicated region
      $region33: #{tpu_custom_call.1} parent=5 // pred_check
        _
      $region34: #{tpu_custom_call.1} parent=5 // pred_check_branch
        %170 = sbr.rel (%p167) target = $region36
      $region35: #{tpu_custom_call.1} parent=5 // pred_region
        %s171 = ssub.s32 %s13, 1
        %s172 = smul.u32 32, %s18
        %p173 = scmp.lt.s32.totalorder %s172, 63
        %s174 = scalar_select %p173, %s172, 63
        %s175 = smul.addr %s174, 8
        %s176 = scalar_lea.vmem %s0, %s175
        %p177 = pneg %p39
        %p178 = pneg %p36
        %p179 = pneg %p60
        %p180 = pneg %p57
        %p181 = pneg %p81
        %p182 = pneg %p78
        %p183 = pneg %p102
        %p184 = pneg %p99
        %p185 = pneg %p128
        %p186 = pneg %p125
        %s187 = sand.u32 %s115, 1
        %s188 = scalar_lea.sflag [#allocation3], %s187
        %s189 = sand.u32 %s115, 1
        %s190 = smul.addr %s189, 256
        %s191 = scalar_lea.vmem [#allocation2], %s190
        %s192 = smul.u32 32, %s18
        %p193 = scmp.lt.s32.totalorder %s192, 63
        %s194 = scalar_select %p193, %s192, 63
        %s195 = smul.addr %s194, 8
        %s196 = scalar_lea.vmem %s0, %s195
        %s197 = smul.u32 32, %s18
        %s198 = smul.u32 32, %s18
        %v199 = vld [vmem:[%s196] sm:$0xff]
        %v200 = vld [vmem:[%s196 + $0x8] sm:$0xff]
        %v201 = vld [vmem:[%s196 + $0x10] sm:$0xff]
        %v202 = vld [vmem:[%s196 + $0x18] sm:$0xff]
        %v203 = vld [vmem:[%s196 + $0x20] sm:$0xff]
        %v204 = vld [vmem:[%s196 + $0x28] sm:$0xff]
        %v205 = vld [vmem:[%s196 + $0x30] sm:$0xff]
        %v206 = vld [vmem:[%s196 + $0x38] sm:$0xff]
        %v207 = vld [vmem:[%s196 + $0x40] sm:$0xff]
        %v208 = vld [vmem:[%s196 + $0x48] sm:$0xff]
        %v209 = vld [vmem:[%s196 + $0x50] sm:$0xff]
        %v210 = vld [vmem:[%s196 + $0x58] sm:$0xff]
        %v211 = vld [vmem:[%s196 + $0x60] sm:$0xff]
        %v212 = vld [vmem:[%s196 + $0x68] sm:$0xff]
        %v213 = vld [vmem:[%s196 + $0x70] sm:$0xff]
        %v214 = vld [vmem:[%s196 + $0x78] sm:$0xff]
        %v215 = vld [vmem:[%s196 + $0x80] sm:$0xff]
        %v216 = vld [vmem:[%s196 + $0x88] sm:$0xff]
        %v217 = vld [vmem:[%s196 + $0x90] sm:$0xff]
        %v218 = vld [vmem:[%s196 + $0x98] sm:$0xff]
        %v219 = vld [vmem:[%s196 + $0xa0] sm:$0xff]
        %v220 = vld [vmem:[%s196 + $0xa8] sm:$0xff]
        %v221 = vld [vmem:[%s196 + $0xb0] sm:$0xff]
        %v222 = vld [vmem:[%s196 + $0xb8] sm:$0xff]
        %v223 = vld [vmem:[%s196 + $0xc0] sm:$0xff]
        %v224 = vld [vmem:[%s196 + $0xc8] sm:$0xff]
        %v225 = vld [vmem:[%s196 + $0xd0] sm:$0xff]
        %v226 = vld [vmem:[%s196 + $0xd8] sm:$0xff]
        %v227 = vld [vmem:[%s196 + $0xe0] sm:$0xff]
        %v228 = vld [vmem:[%s196 + $0xe8] sm:$0xff]
        %v229 = vld [vmem:[%s196 + $0xf0] sm:$0xff]
        %v230 = vld [vmem:[%s196 + $0xf8] sm:$0xff]
        %v231 = vld [vmem:[%s1] sm:$0xff]
        %v232 = vld [vmem:[%s1 + $0x8] sm:$0xff]
        %v233 = vld [vmem:[%s1 + $0x10] sm:$0xff]
        %v234 = vld [vmem:[%s1 + $0x18] sm:$0xff]
        %v235 = vld [vmem:[%s1 + $0x20] sm:$0xf]
        %vm236 = vcmask 293888
        %v238 = vsel %vm236, %v199, 0
        %v241 = vsel %vm236, %v200, 0
        %v244 = vsel %vm236, %v201, 0
        %v247 = vsel %vm236, %v202, 0
        %v250 = vsel %vm236, %v203, 0
        %v253 = vsel %vm236, %v204, 0
        %v256 = vsel %vm236, %v205, 0
        %v259 = vsel %vm236, %v206, 0
        %v262 = vsel %vm236, %v207, 0
        %v265 = vsel %vm236, %v208, 0
        %v268 = vsel %vm236, %v209, 0
        %v271 = vsel %vm236, %v210, 0
        %v274 = vsel %vm236, %v211, 0
        %v277 = vsel %vm236, %v212, 0
        %v280 = vsel %vm236, %v213, 0
        %v283 = vsel %vm236, %v214, 0
        %v286 = vsel %vm236, %v215, 0
        %v289 = vsel %vm236, %v216, 0
        %v292 = vsel %vm236, %v217, 0
        %v295 = vsel %vm236, %v218, 0
        %v298 = vsel %vm236, %v219, 0
        %v301 = vsel %vm236, %v220, 0
        %v304 = vsel %vm236, %v221, 0
        %v307 = vsel %vm236, %v222, 0
        %v310 = vsel %vm236, %v223, 0
        %v313 = vsel %vm236, %v224, 0
        %v316 = vsel %vm236, %v225, 0
        %v319 = vsel %vm236, %v226, 0
        %v322 = vsel %vm236, %v227, 0
        %v325 = vsel %vm236, %v228, 0
        %v328 = vsel %vm236, %v229, 0
        %v331 = vsel %vm236, %v230, 0
        %vm333 = vcmask 1043456
        %v335 = vsel %vm333, %v235, 0
        %337 = vmatprep.subr.mxu0 0.0
        %338 = vmatpush1.msra.mxu0 %v231
        %339 = vmatprep.subr.mxu0 0.0
        %340 = vmatpush1.msra.mxu0 %v232
        %341 = vmatprep.subr.mxu0 0.0
        %342 = vmatpush1.msra.mxu0 %v233
        %343 = vmatprep.subr.mxu0 0.0
        %344 = vmatpush1.msra.mxu0 %v234
        %345 = vmatprep.subr.mxu0 0.0
        %346 = vmatpush1.msra.mxu0 %v335
        %347 = vmatprep.subr.mxu0 0.0
        %348 = vmatpush1.msra.mxu0 0.0
        %349 = vmatprep.subr.mxu0 0.0
        %350 = vmatpush1.msra.mxu0 0.0
        %351 = vmatprep.subr.mxu0 0.0
        %352 = vmatpush1.msra.mxu0 0.0
        %353 = vmatprep.subr.mxu0 0.0
        %354 = vmatpush1.msra.mxu0 0.0
        %355 = vmatprep.subr.mxu0 0.0
        %356 = vmatpush1.msra.mxu0 0.0
        %357 = vmatprep.subr.mxu0 0.0
        %358 = vmatpush1.msra.mxu0 0.0
        %359 = vmatprep.subr.mxu0 0.0
        %360 = vmatpush1.msra.mxu0 0.0
        %361 = vmatprep.subr.mxu0 0.0
        %362 = vmatpush1.msra.mxu0 0.0
        %363 = vmatprep.subr.mxu0 0.0
        %364 = vmatpush1.msra.mxu0 0.0
        %365 = vmatprep.subr.mxu0 0.0
        %366 = vmatpush1.msra.mxu0 0.0
        %367 = vmatprep.subr.mxu0 0.0
        %368 = vmatpush1.msra.mxu0 0.0
        %369 = vmatprep.subr.mxu0 0.0
        %370 = vmatpush1.msra.mxu0 0.0
        %371 = vmatprep.subr.mxu0 0.0
        %372 = vmatpush1.msra.mxu0 0.0
        %373 = vmatprep.subr.mxu0 0.0
        %374 = vmatpush1.msra.mxu0 0.0
        %375 = vmatprep.subr.mxu0 0.0
        %376 = vmatpush1.msra.mxu0 0.0
        %377 = vmatprep.subr.mxu0 0.0
        %378 = vmatpush1.msra.mxu0 0.0
        %379 = vmatprep.subr.mxu0 0.0
        %380 = vmatpush1.msra.mxu0 0.0
        %381 = vmatprep.subr.mxu0 0.0
        %382 = vmatpush1.msra.mxu0 0.0
        %383 = vmatprep.subr.mxu0 0.0
        %384 = vmatpush1.msra.mxu0 0.0
        %385 = vmatprep.subr.mxu0 0.0
        %386 = vmatpush1.msra.mxu0 0.0
        %387 = vmatprep.subr.mxu0 0.0
        %388 = vmatpush1.msra.mxu0 0.0
        %389 = vmatprep.subr.mxu0 0.0
        %390 = vmatpush1.msra.mxu0 0.0
        %391 = vmatprep.subr.mxu0 0.0
        %392 = vmatpush1.msra.mxu0 0.0
        %393 = vmatprep.subr.mxu0 0.0
        %394 = vmatpush1.msra.mxu0 0.0
        %395 = vmatprep.subr.mxu0 0.0
        %396 = vmatpush1.msra.mxu0 0.0
        %397 = vmatprep.subr.mxu0 0.0
        %398 = vmatpush1.msra.mxu0 0.0
        %399 = vmatprep.subr.mxu0 0.0
        %400 = vmatpush1.msra.mxu0 0.0
        %401 = vmatprep.mubr.f32.mxu0 0.0
        %402 = vmatmul.mubr.f32.gmra.mrb[0].mxu0 %v238
        %v403 = vpop.f32.mrb[0].mxu0
        %v404 = vadd.f32 0.0, %v403
        %v405 = vpop.f32.mrb[0].mxu0
        %406 = vmatprep.mubr.f32.mxu0 0.0
        %407 = vmatmul.mubr.f32.gmra.mrb[0].mxu0 %v241
        %v408 = vpop.f32.mrb[0].mxu0
        %v409 = vadd.f32 0.0, %v408
        %v410 = vpop.f32.mrb[0].mxu0
        %411 = vmatprep.mubr.f32.mxu0 0.0
        %412 = vmatmul.mubr.f32.gmra.mrb[0].mxu0 %v244
        %v413 = vpop.f32.mrb[0].mxu0
        %v414 = vadd.f32 0.0, %v413
        %v415 = vpop.f32.mrb[0].mxu0
        %416 = vmatprep.mubr.f32.mxu0 0.0
        %417 = vmatmul.mubr.f32.gmra.mrb[0].mxu0 %v247
        %v418 = vpop.f32.mrb[0].mxu0
        %v419 = vadd.f32 0.0, %v418
        %v420 = vpop.f32.mrb[0].mxu0
        %421 = vmatprep.mubr.f32.mxu0 0.0
        %422 = vmatmul.mubr.f32.gmra.mrb[0].mxu0 %v250
        %v423 = vpop.f32.mrb[0].mxu0
        %v424 = vadd.f32 0.0, %v423
        %v425 = vpop.f32.mrb[0].mxu0
        %426 = vmatprep.mubr.f32.mxu0 0.0
        %427 = vmatmul.mubr.f32.gmra.mrb[0].mxu0 %v253
        %v428 = vpop.f32.mrb[0].mxu0
        %v429 = vadd.f32 0.0, %v428
        %v430 = vpop.f32.mrb[0].mxu0
        %431 = vmatprep.mubr.f32.mxu0 0.0
        %432 = vmatmul.mubr.f32.gmra.mrb[0].mxu0 %v256
        %v433 = vpop.f32.mrb[0].mxu0
        %v434 = vadd.f32 0.0, %v433
        %v435 = vpop.f32.mrb[0].mxu0
        %436 = vmatprep.mubr.f32.mxu0 0.0
        %437 = vmatmul.mubr.f32.gmra.mrb[0].mxu0 %v259
        %v438 = vpop.f32.mrb[0].mxu0
        %v439 = vadd.f32 0.0, %v438
        %v440 = vpop.f32.mrb[0].mxu0
        %441 = vmatprep.mubr.f32.mxu0 0.0
        %442 = vmatmul.mubr.f32.gmra.mrb[0].mxu0 %v262
        %v443 = vpop.f32.mrb[0].mxu0
        %v444 = vadd.f32 0.0, %v443
        %v445 = vpop.f32.mrb[0].mxu0
        %446 = vmatprep.mubr.f32.mxu0 0.0
        %447 = vmatmul.mubr.f32.gmra.mrb[0].mxu0 %v265
        %v448 = vpop.f32.mrb[0].mxu0
        %v449 = vadd.f32 0.0, %v448
        %v450 = vpop.f32.mrb[0].mxu0
        %451 = vmatprep.mubr.f32.mxu0 0.0
        %452 = vmatmul.mubr.f32.gmra.mrb[0].mxu0 %v268
        %v453 = vpop.f32.mrb[0].mxu0
        %v454 = vadd.f32 0.0, %v453
        %v455 = vpop.f32.mrb[0].mxu0
        %456 = vmatprep.mubr.f32.mxu0 0.0
        %457 = vmatmul.mubr.f32.gmra.mrb[0].mxu0 %v271
        %v458 = vpop.f32.mrb[0].mxu0
        %v459 = vadd.f32 0.0, %v458
        %v460 = vpop.f32.mrb[0].mxu0
        %461 = vmatprep.mubr.f32.mxu0 0.0
        %462 = vmatmul.mubr.f32.gmra.mrb[0].mxu0 %v274
        %v463 = vpop.f32.mrb[0].mxu0
        %v464 = vadd.f32 0.0, %v463
        %v465 = vpop.f32.mrb[0].mxu0
        %466 = vmatprep.mubr.f32.mxu0 0.0
        %467 = vmatmul.mubr.f32.gmra.mrb[0].mxu0 %v277
        %v468 = vpop.f32.mrb[0].mxu0
        %v469 = vadd.f32 0.0, %v468
        %v470 = vpop.f32.mrb[0].mxu0
        %471 = vmatprep.mubr.f32.mxu0 0.0
        %472 = vmatmul.mubr.f32.gmra.mrb[0].mxu0 %v280
        %v473 = vpop.f32.mrb[0].mxu0
        %v474 = vadd.f32 0.0, %v473
        %v475 = vpop.f32.mrb[0].mxu0
        %476 = vmatprep.mubr.f32.mxu0 0.0
        %477 = vmatmul.mubr.f32.gmra.mrb[0].mxu0 %v283
        %v478 = vpop.f32.mrb[0].mxu0
        %v479 = vadd.f32 0.0, %v478
        %v480 = vpop.f32.mrb[0].mxu0
        %481 = vmatprep.mubr.f32.mxu0 0.0
        %482 = vmatmul.mubr.f32.gmra.mrb[0].mxu0 %v286
        %v483 = vpop.f32.mrb[0].mxu0
        %v484 = vadd.f32 0.0, %v483
        %v485 = vpop.f32.mrb[0].mxu0
        %486 = vmatprep.mubr.f32.mxu0 0.0
        %487 = vmatmul.mubr.f32.gmra.mrb[0].mxu0 %v289
        %v488 = vpop.f32.mrb[0].mxu0
        %v489 = vadd.f32 0.0, %v488
        %v490 = vpop.f32.mrb[0].mxu0
        %491 = vmatprep.mubr.f32.mxu0 0.0
        %492 = vmatmul.mubr.f32.gmra.mrb[0].mxu0 %v292
        %v493 = vpop.f32.mrb[0].mxu0
        %v494 = vadd.f32 0.0, %v493
        %v495 = vpop.f32.mrb[0].mxu0
        %496 = vmatprep.mubr.f32.mxu0 0.0
        %497 = vmatmul.mubr.f32.gmra.mrb[0].mxu0 %v295
        %v498 = vpop.f32.mrb[0].mxu0
        %v499 = vadd.f32 0.0, %v498
        %v500 = vpop.f32.mrb[0].mxu0
        %501 = vmatprep.mubr.f32.mxu0 0.0
        %502 = vmatmul.mubr.f32.gmra.mrb[0].mxu0 %v298
        %v503 = vpop.f32.mrb[0].mxu0
        %v504 = vadd.f32 0.0, %v503
        %v505 = vpop.f32.mrb[0].mxu0
        %506 = vmatprep.mubr.f32.mxu0 0.0
        %507 = vmatmul.mubr.f32.gmra.mrb[0].mxu0 %v301
        %v508 = vpop.f32.mrb[0].mxu0
        %v509 = vadd.f32 0.0, %v508
        %v510 = vpop.f32.mrb[0].mxu0
        %511 = vmatprep.mubr.f32.mxu0 0.0
        %512 = vmatmul.mubr.f32.gmra.mrb[0].mxu0 %v304
        %v513 = vpop.f32.mrb[0].mxu0
        %v514 = vadd.f32 0.0, %v513
        %v515 = vpop.f32.mrb[0].mxu0
        %516 = vmatprep.mubr.f32.mxu0 0.0
        %517 = vmatmul.mubr.f32.gmra.mrb[0].mxu0 %v307
        %v518 = vpop.f32.mrb[0].mxu0
        %v519 = vadd.f32 0.0, %v518
        %v520 = vpop.f32.mrb[0].mxu0
        %521 = vmatprep.mubr.f32.mxu0 0.0
        %522 = vmatmul.mubr.f32.gmra.mrb[0].mxu0 %v310
        %v523 = vpop.f32.mrb[0].mxu0
        %v524 = vadd.f32 0.0, %v523
        %v525 = vpop.f32.mrb[0].mxu0
        %526 = vmatprep.mubr.f32.mxu0 0.0
        %527 = vmatmul.mubr.f32.gmra.mrb[0].mxu0 %v313
        %v528 = vpop.f32.mrb[0].mxu0
        %v529 = vadd.f32 0.0, %v528
        %v530 = vpop.f32.mrb[0].mxu0
        %531 = vmatprep.mubr.f32.mxu0 0.0
        %532 = vmatmul.mubr.f32.gmra.mrb[0].mxu0 %v316
        %v533 = vpop.f32.mrb[0].mxu0
        %v534 = vadd.f32 0.0, %v533
        %v535 = vpop.f32.mrb[0].mxu0
        %536 = vmatprep.mubr.f32.mxu0 0.0
        %537 = vmatmul.mubr.f32.gmra.mrb[0].mxu0 %v319
        %v538 = vpop.f32.mrb[0].mxu0
        %v539 = vadd.f32 0.0, %v538
        %v540 = vpop.f32.mrb[0].mxu0
        %541 = vmatprep.mubr.f32.mxu0 0.0
        %542 = vmatmul.mubr.f32.gmra.mrb[0].mxu0 %v322
        %v543 = vpop.f32.mrb[0].mxu0
        %v544 = vadd.f32 0.0, %v543
        %v545 = vpop.f32.mrb[0].mxu0
        %546 = vmatprep.mubr.f32.mxu0 0.0
        %547 = vmatmul.mubr.f32.gmra.mrb[0].mxu0 %v325
        %v548 = vpop.f32.mrb[0].mxu0
        %v549 = vadd.f32 0.0, %v548
        %v550 = vpop.f32.mrb[0].mxu0
        %551 = vmatprep.mubr.f32.mxu0 0.0
        %552 = vmatmul.mubr.f32.gmra.mrb[0].mxu0 %v328
        %v553 = vpop.f32.mrb[0].mxu0
        %v554 = vadd.f32 0.0, %v553
        %v555 = vpop.f32.mrb[0].mxu0
        %556 = vmatprep.mubr.f32.mxu0 0.0
        %557 = vmatmul.mubr.f32.gmra.mrb[0].mxu0 %v331
        %v558 = vpop.f32.mrb[0].mxu0
        %v559 = vadd.f32 0.0, %v558
        %v560 = vpop.f32.mrb[0].mxu0
        %561 = vdwg.mxu0
        %v562 = vld [vmem:[%s2] sm:$0xff]
        %v563 = vld [vmem:[%s3] sm:$0x1]
        %v565 = vlaneseq
        %v566 = vshrl.u32 %v565, 7
        %v567 = vsub.s32 0, %v566
        %v568 = vrot.slane %v563, %v567
        %vm570 = vcmask 64512
        %v572 = vsel %vm570, %v404, 0
        %v575 = vsel %vm570, %v409, 0
        %v578 = vsel %vm570, %v414, 0
        %v581 = vsel %vm570, %v419, 0
        %v584 = vsel %vm570, %v424, 0
        %v587 = vsel %vm570, %v429, 0
        %v590 = vsel %vm570, %v434, 0
        %v593 = vsel %vm570, %v439, 0
        %v596 = vsel %vm570, %v444, 0
        %v599 = vsel %vm570, %v449, 0
        %v602 = vsel %vm570, %v454, 0
        %v605 = vsel %vm570, %v459, 0
        %v608 = vsel %vm570, %v464, 0
        %v611 = vsel %vm570, %v469, 0
        %v614 = vsel %vm570, %v474, 0
        %v617 = vsel %vm570, %v479, 0
        %v620 = vsel %vm570, %v484, 0
        %v623 = vsel %vm570, %v489, 0
        %v626 = vsel %vm570, %v494, 0
        %v629 = vsel %vm570, %v499, 0
        %v632 = vsel %vm570, %v504, 0
        %v635 = vsel %vm570, %v509, 0
        %v638 = vsel %vm570, %v514, 0
        %v641 = vsel %vm570, %v519, 0
        %v644 = vsel %vm570, %v524, 0
        %v647 = vsel %vm570, %v529, 0
        %v650 = vsel %vm570, %v534, 0
        %v653 = vsel %vm570, %v539, 0
        %v656 = vsel %vm570, %v544, 0
        %v659 = vsel %vm570, %v549, 0
        %v662 = vsel %vm570, %v554, 0
        %v665 = vsel %vm570, %v559, 0
        %667 = vmatprep.subr.mxu0 0.0
        %668 = vmatpush1.msra.mxu0 %v562
        %669 = vmatprep.subr.mxu0 0.0
        %670 = vmatpush1.msra.mxu0 0.0
        %671 = vmatprep.subr.mxu0 0.0
        %672 = vmatpush1.msra.mxu0 0.0
        %673 = vmatprep.subr.mxu0 0.0
        %674 = vmatpush1.msra.mxu0 0.0
        %675 = vmatprep.subr.mxu0 0.0
        %676 = vmatpush1.msra.mxu0 0.0
        %677 = vmatprep.subr.mxu0 0.0
        %678 = vmatpush1.msra.mxu0 0.0
        %679 = vmatprep.subr.mxu0 0.0
        %680 = vmatpush1.msra.mxu0 0.0
        %681 = vmatprep.subr.mxu0 0.0
        %682 = vmatpush1.msra.mxu0 0.0
        %683 = vmatprep.subr.mxu0 0.0
        %684 = vmatpush1.msra.mxu0 0.0
        %685 = vmatprep.subr.mxu0 0.0
        %686 = vmatpush1.msra.mxu0 0.0
        %687 = vmatprep.subr.mxu0 0.0
        %688 = vmatpush1.msra.mxu0 0.0
        %689 = vmatprep.subr.mxu0 0.0
        %690 = vmatpush1.msra.mxu0 0.0
        %691 = vmatprep.subr.mxu0 0.0
        %692 = vmatpush1.msra.mxu0 0.0
        %693 = vmatprep.subr.mxu0 0.0
        %694 = vmatpush1.msra.mxu0 0.0
        %695 = vmatprep.subr.mxu0 0.0
        %696 = vmatpush1.msra.mxu0 0.0
        %697 = vmatprep.subr.mxu0 0.0
        %698 = vmatpush1.msra.mxu0 0.0
        %699 = vmatprep.subr.mxu0 0.0
        %700 = vmatpush1.msra.mxu0 0.0
        %701 = vmatprep.subr.mxu0 0.0
        %702 = vmatpush1.msra.mxu0 0.0
        %703 = vmatprep.subr.mxu0 0.0
        %704 = vmatpush1.msra.mxu0 0.0
        %705 = vmatprep.subr.mxu0 0.0
        %706 = vmatpush1.msra.mxu0 0.0
        %707 = vmatprep.subr.mxu0 0.0
        %708 = vmatpush1.msra.mxu0 0.0
        %709 = vmatprep.subr.mxu0 0.0
        %710 = vmatpush1.msra.mxu0 0.0
        %711 = vmatprep.subr.mxu0 0.0
        %712 = vmatpush1.msra.mxu0 0.0
        %713 = vmatprep.subr.mxu0 0.0
        %714 = vmatpush1.msra.mxu0 0.0
        %715 = vmatprep.subr.mxu0 0.0
        %716 = vmatpush1.msra.mxu0 0.0
        %717 = vmatprep.subr.mxu0 0.0
        %718 = vmatpush1.msra.mxu0 0.0
        %719 = vmatprep.subr.mxu0 0.0
        %720 = vmatpush1.msra.mxu0 0.0
        %721 = vmatprep.subr.mxu0 0.0
        %722 = vmatpush1.msra.mxu0 0.0
        %723 = vmatprep.subr.mxu0 0.0
        %724 = vmatpush1.msra.mxu0 0.0
        %725 = vmatprep.subr.mxu0 0.0
        %726 = vmatpush1.msra.mxu0 0.0
        %727 = vmatprep.subr.mxu0 0.0
        %728 = vmatpush1.msra.mxu0 0.0
        %729 = vmatprep.subr.mxu0 0.0
        %730 = vmatpush1.msra.mxu0 0.0
        %731 = vmatprep.mubr.f32.mxu0 0.0
        %732 = vmatmul.mubr.f32.gmra.mrb[0].mxu0 %v572
        %v733 = vpop.f32.mrb[0].mxu0
        %v734 = vadd.f32 %v568, %v733
        %v735 = vpop.f32.mrb[0].mxu0
        %736 = vmatprep.mubr.f32.mxu0 0.0
        %737 = vmatmul.mubr.f32.gmra.mrb[0].mxu0 %v575
        %v738 = vpop.f32.mrb[0].mxu0
        %v739 = vadd.f32 %v568, %v738
        %v740 = vpop.f32.mrb[0].mxu0
        %741 = vmatprep.mubr.f32.mxu0 0.0
        %742 = vmatmul.mubr.f32.gmra.mrb[0].mxu0 %v578
        %v743 = vpop.f32.mrb[0].mxu0
        %v744 = vadd.f32 %v568, %v743
        %v745 = vpop.f32.mrb[0].mxu0
        %746 = vmatprep.mubr.f32.mxu0 0.0
        %747 = vmatmul.mubr.f32.gmra.mrb[0].mxu0 %v581
        %v748 = vpop.f32.mrb[0].mxu0
        %v749 = vadd.f32 %v568, %v748
        %v750 = vpop.f32.mrb[0].mxu0
        %751 = vmatprep.mubr.f32.mxu0 0.0
        %752 = vmatmul.mubr.f32.gmra.mrb[0].mxu0 %v584
        %v753 = vpop.f32.mrb[0].mxu0
        %v754 = vadd.f32 %v568, %v753
        %v755 = vpop.f32.mrb[0].mxu0
        %756 = vmatprep.mubr.f32.mxu0 0.0
        %757 = vmatmul.mubr.f32.gmra.mrb[0].mxu0 %v587
        %v758 = vpop.f32.mrb[0].mxu0
        %v759 = vadd.f32 %v568, %v758
        %v760 = vpop.f32.mrb[0].mxu0
        %761 = vmatprep.mubr.f32.mxu0 0.0
        %762 = vmatmul.mubr.f32.gmra.mrb[0].mxu0 %v590
        %v763 = vpop.f32.mrb[0].mxu0
        %v764 = vadd.f32 %v568, %v763
        %v765 = vpop.f32.mrb[0].mxu0
        %766 = vmatprep.mubr.f32.mxu0 0.0
        %767 = vmatmul.mubr.f32.gmra.mrb[0].mxu0 %v593
        %v768 = vpop.f32.mrb[0].mxu0
        %v769 = vadd.f32 %v568, %v768
        %v770 = vpop.f32.mrb[0].mxu0
        %771 = vmatprep.mubr.f32.mxu0 0.0
        %772 = vmatmul.mubr.f32.gmra.mrb[0].mxu0 %v596
        %v773 = vpop.f32.mrb[0].mxu0
        %v774 = vadd.f32 %v568, %v773
        %v775 = vpop.f32.mrb[0].mxu0
        %776 = vmatprep.mubr.f32.mxu0 0.0
        %777 = vmatmul.mubr.f32.gmra.mrb[0].mxu0 %v599
        %v778 = vpop.f32.mrb[0].mxu0
        %v779 = vadd.f32 %v568, %v778
        %v780 = vpop.f32.mrb[0].mxu0
        %781 = vmatprep.mubr.f32.mxu0 0.0
        %782 = vmatmul.mubr.f32.gmra.mrb[0].mxu0 %v602
        %v783 = vpop.f32.mrb[0].mxu0
        %v784 = vadd.f32 %v568, %v783
        %v785 = vpop.f32.mrb[0].mxu0
        %786 = vmatprep.mubr.f32.mxu0 0.0
        %787 = vmatmul.mubr.f32.gmra.mrb[0].mxu0 %v605
        %v788 = vpop.f32.mrb[0].mxu0
        %v789 = vadd.f32 %v568, %v788
        %v790 = vpop.f32.mrb[0].mxu0
        %791 = vmatprep.mubr.f32.mxu0 0.0
        %792 = vmatmul.mubr.f32.gmra.mrb[0].mxu0 %v608
        %v793 = vpop.f32.mrb[0].mxu0
        %v794 = vadd.f32 %v568, %v793
        %v795 = vpop.f32.mrb[0].mxu0
        %796 = vmatprep.mubr.f32.mxu0 0.0
        %797 = vmatmul.mubr.f32.gmra.mrb[0].mxu0 %v611
        %v798 = vpop.f32.mrb[0].mxu0
        %v799 = vadd.f32 %v568, %v798
        %v800 = vpop.f32.mrb[0].mxu0
        %801 = vmatprep.mubr.f32.mxu0 0.0
        %802 = vmatmul.mubr.f32.gmra.mrb[0].mxu0 %v614
        %v803 = vpop.f32.mrb[0].mxu0
        %v804 = vadd.f32 %v568, %v803
        %v805 = vpop.f32.mrb[0].mxu0
        %806 = vmatprep.mubr.f32.mxu0 0.0
        %807 = vmatmul.mubr.f32.gmra.mrb[0].mxu0 %v617
        %v808 = vpop.f32.mrb[0].mxu0
        %v809 = vadd.f32 %v568, %v808
        %v810 = vpop.f32.mrb[0].mxu0
        %811 = vmatprep.mubr.f32.mxu0 0.0
        %812 = vmatmul.mubr.f32.gmra.mrb[0].mxu0 %v620
        %v813 = vpop.f32.mrb[0].mxu0
        %v814 = vadd.f32 %v568, %v813
        %v815 = vpop.f32.mrb[0].mxu0
        %816 = vmatprep.mubr.f32.mxu0 0.0
        %817 = vmatmul.mubr.f32.gmra.mrb[0].mxu0 %v623
        %v818 = vpop.f32.mrb[0].mxu0
        %v819 = vadd.f32 %v568, %v818
        %v820 = vpop.f32.mrb[0].mxu0
        %821 = vmatprep.mubr.f32.mxu0 0.0
        %822 = vmatmul.mubr.f32.gmra.mrb[0].mxu0 %v626
        %v823 = vpop.f32.mrb[0].mxu0
        %v824 = vadd.f32 %v568, %v823
        %v825 = vpop.f32.mrb[0].mxu0
        %826 = vmatprep.mubr.f32.mxu0 0.0
        %827 = vmatmul.mubr.f32.gmra.mrb[0].mxu0 %v629
        %v828 = vpop.f32.mrb[0].mxu0
        %v829 = vadd.f32 %v568, %v828
        %v830 = vpop.f32.mrb[0].mxu0
        %831 = vmatprep.mubr.f32.mxu0 0.0
        %832 = vmatmul.mubr.f32.gmra.mrb[0].mxu0 %v632
        %v833 = vpop.f32.mrb[0].mxu0
        %v834 = vadd.f32 %v568, %v833
        %v835 = vpop.f32.mrb[0].mxu0
        %836 = vmatprep.mubr.f32.mxu0 0.0
        %837 = vmatmul.mubr.f32.gmra.mrb[0].mxu0 %v635
        %v838 = vpop.f32.mrb[0].mxu0
        %v839 = vadd.f32 %v568, %v838
        %v840 = vpop.f32.mrb[0].mxu0
        %841 = vmatprep.mubr.f32.mxu0 0.0
        %842 = vmatmul.mubr.f32.gmra.mrb[0].mxu0 %v638
        %v843 = vpop.f32.mrb[0].mxu0
        %v844 = vadd.f32 %v568, %v843
        %v845 = vpop.f32.mrb[0].mxu0
        %846 = vmatprep.mubr.f32.mxu0 0.0
        %847 = vmatmul.mubr.f32.gmra.mrb[0].mxu0 %v641
        %v848 = vpop.f32.mrb[0].mxu0
        %v849 = vadd.f32 %v568, %v848
        %v850 = vpop.f32.mrb[0].mxu0
        %851 = vmatprep.mubr.f32.mxu0 0.0
        %852 = vmatmul.mubr.f32.gmra.mrb[0].mxu0 %v644
        %v853 = vpop.f32.mrb[0].mxu0
        %v854 = vadd.f32 %v568, %v853
        %v855 = vpop.f32.mrb[0].mxu0
        %856 = vmatprep.mubr.f32.mxu0 0.0
        %857 = vmatmul.mubr.f32.gmra.mrb[0].mxu0 %v647
        %v858 = vpop.f32.mrb[0].mxu0
        %v859 = vadd.f32 %v568, %v858
        %v860 = vpop.f32.mrb[0].mxu0
        %861 = vmatprep.mubr.f32.mxu0 0.0
        %862 = vmatmul.mubr.f32.gmra.mrb[0].mxu0 %v650
        %v863 = vpop.f32.mrb[0].mxu0
        %v864 = vadd.f32 %v568, %v863
        %v865 = vpop.f32.mrb[0].mxu0
        %866 = vmatprep.mubr.f32.mxu0 0.0
        %867 = vmatmul.mubr.f32.gmra.mrb[0].mxu0 %v653
        %v868 = vpop.f32.mrb[0].mxu0
        %v869 = vadd.f32 %v568, %v868
        %v870 = vpop.f32.mrb[0].mxu0
        %871 = vmatprep.mubr.f32.mxu0 0.0
        %872 = vmatmul.mubr.f32.gmra.mrb[0].mxu0 %v656
        %v873 = vpop.f32.mrb[0].mxu0
        %v874 = vadd.f32 %v568, %v873
        %v875 = vpop.f32.mrb[0].mxu0
        %876 = vmatprep.mubr.f32.mxu0 0.0
        %877 = vmatmul.mubr.f32.gmra.mrb[0].mxu0 %v659
        %v878 = vpop.f32.mrb[0].mxu0
        %v879 = vadd.f32 %v568, %v878
        %v880 = vpop.f32.mrb[0].mxu0
        %881 = vmatprep.mubr.f32.mxu0 0.0
        %882 = vmatmul.mubr.f32.gmra.mrb[0].mxu0 %v662
        %v883 = vpop.f32.mrb[0].mxu0
        %v884 = vadd.f32 %v568, %v883
        %v885 = vpop.f32.mrb[0].mxu0
        %886 = vmatprep.mubr.f32.mxu0 0.0
        %887 = vmatmul.mubr.f32.gmra.mrb[0].mxu0 %v665
        %v888 = vpop.f32.mrb[0].mxu0
        %v889 = vadd.f32 %v568, %v888
        %v890 = vpop.f32.mrb[0].mxu0
        %891 = vdwg.mxu0
        %892 = vst [vmem:[%s191] sm:$0xff] %v734
        %893 = vst [vmem:[%s191 + $0x8] sm:$0xff] %v739
        %894 = vst [vmem:[%s191 + $0x10] sm:$0xff] %v744
        %895 = vst [vmem:[%s191 + $0x18] sm:$0xff] %v749
        %896 = vst [vmem:[%s191 + $0x20] sm:$0xff] %v754
        %897 = vst [vmem:[%s191 + $0x28] sm:$0xff] %v759
        %898 = vst [vmem:[%s191 + $0x30] sm:$0xff] %v764
        %899 = vst [vmem:[%s191 + $0x38] sm:$0xff] %v769
        %900 = vst [vmem:[%s191 + $0x40] sm:$0xff] %v774
        %901 = vst [vmem:[%s191 + $0x48] sm:$0xff] %v779
        %902 = vst [vmem:[%s191 + $0x50] sm:$0xff] %v784
        %903 = vst [vmem:[%s191 + $0x58] sm:$0xff] %v789
        %904 = vst [vmem:[%s191 + $0x60] sm:$0xff] %v794
        %905 = vst [vmem:[%s191 + $0x68] sm:$0xff] %v799
        %906 = vst [vmem:[%s191 + $0x70] sm:$0xff] %v804
        %907 = vst [vmem:[%s191 + $0x78] sm:$0xff] %v809
        %908 = vst [vmem:[%s191 + $0x80] sm:$0xff] %v814
        %909 = vst [vmem:[%s191 + $0x88] sm:$0xff] %v819
        %910 = vst [vmem:[%s191 + $0x90] sm:$0xff] %v824
        %911 = vst [vmem:[%s191 + $0x98] sm:$0xff] %v829
        %912 = vst [vmem:[%s191 + $0xa0] sm:$0xff] %v834
        %913 = vst [vmem:[%s191 + $0xa8] sm:$0xff] %v839
        %914 = vst [vmem:[%s191 + $0xb0] sm:$0xff] %v844
        %915 = vst [vmem:[%s191 + $0xb8] sm:$0xff] %v849
        %916 = vst [vmem:[%s191 + $0xc0] sm:$0xff] %v854
        %917 = vst [vmem:[%s191 + $0xc8] sm:$0xff] %v859
        %918 = vst [vmem:[%s191 + $0xd0] sm:$0xff] %v864
        %919 = vst [vmem:[%s191 + $0xd8] sm:$0xff] %v869
        %920 = vst [vmem:[%s191 + $0xe0] sm:$0xff] %v874
        %921 = vst [vmem:[%s191 + $0xe8] sm:$0xff] %v879
        %922 = vst [vmem:[%s191 + $0xf0] sm:$0xff] %v884
        %923 = vst [vmem:[%s191 + $0xf8] sm:$0xff] %v889
        %s924 = sand.u32 %s115, 1
        %s925 = scalar_lea.sflag [#allocation3], %s924
        %s926 = sand.u32 %s115, 1
        %s927 = smul.addr %s926, 256
        %s928 = scalar_lea.vmem [#allocation2], %s927
        // Predicated region
        $region37: #{tpu_custom_call.1} parent=35 // pred_check
          %p929 = pneg %p125
        $region38: #{tpu_custom_call.1} parent=35 // pred_check_branch
          %931 = sbr.rel (%p929) target = $region40
        $region39: #{tpu_custom_call.1} parent=35 // pred_region
          %s932 = smul.u32 32, %s18
          %s934 = ssub.s32 4096, 4096
          %935 = vsyncadd %s925, %s934
          %s936 = smul.addr %s932, 128
          %s937 = scalar_lea.hbm %s4, %s936
          %s938 = sshll.u32 %s928, 4
          %s939 = int_to_ptr.vmem [resolvable:$true] %s938
          %944 = dma.vmem_to_hbm [thread:$0]  %s939, 4096, %s937, %s925, 128, 128, 8
        $region40: #{tpu_custom_call.1} parent=35 // pred_fallthru
          _
      $region36: #{tpu_custom_call.1} parent=5 // pred_fallthru
        _
      %p945 = scmp.le.s32.totalorder 2, %s13
      // Predicated region
      $region41: #{tpu_custom_call.1} parent=5 // pred_check
        %p946 = pneg %p945
      $region42: #{tpu_custom_call.1} parent=5 // pred_check_branch
        %948 = sbr.rel (%p946) target = $region44
      $region43: #{tpu_custom_call.1} parent=5 // pred_region
        %s949 = ssub.s32 %s13, 2
        // Predicated region
        $region45: #{tpu_custom_call.1} parent=43 // pred_check
          %p950 = pneg %p131
        $region46: #{tpu_custom_call.1} parent=43 // pred_check_branch
          %952 = sbr.rel (%p950) target = $region48
        $region47: #{tpu_custom_call.1} parent=43 // pred_region
          %s953 = sand.u32 %s116, 1
          %s954 = scalar_lea.sflag [#allocation3], %s953
          %s955 = sand.u32 %s116, 1
          %s956 = smul.addr %s955, 256
          %s957 = scalar_lea.vmem [#allocation2], %s956
          %958 = dma.done %s954, 4096
        $region48: #{tpu_custom_call.1} parent=43 // pred_fallthru
          _
      $region44: #{tpu_custom_call.1} parent=5 // pred_fallthru
        _
    $region6: #{tpu_custom_call.1} parent=1 // loop_footer
      %s17 = sadd.s32 1, %s13
    $region7: #{tpu_custom_call.1} parent=1 // loop_footer_branch
      %12 = sbr.rel target = $region3
    $region8: #{tpu_custom_call.1} parent=1 // loop_exit
      _
    %959 = vsyncpa [#allocation3], 1
    %s960 = scalar_lea.sflag [#allocation3], 1
    %961 = vsyncpa %s960, 1

</llo_original>
